<compile_context>
chip_gen: v6e
topology: v6e:2x2x1
jax: 0.10.0
libtpu: 0.0.40
codegen_flags: <defaults>
</compile_context>

<pallas_src>
import jax
import jax.numpy as jnp
from jax.experimental import pallas as pl
from jax.experimental.pallas import tpu as pltpu


def _rotary_combine_kernel(cos_a_ref, sin_a_ref, cos_b_ref, sin_b_ref,
                           cos_ref, sin_ref):
    """cos/sin(A + B) via the angle-addition identity (pure VPU mul/add).

    cos_a/sin_a : (tile_groups, L)  grid-invariant local-angle tables
    cos_b/sin_b : (1, 1, L)         per-grid-step base-angle row
    cos/sin out : (tile_groups, L)
    """
    ca = cos_a_ref[...]
    sa = sin_a_ref[...]
    cb = cos_b_ref[0]                     # (1, L) -> broadcasts over sublanes
    sb = sin_b_ref[0]
    cos_ref[...] = (ca * cb - sa * sb).astype(cos_ref.dtype)
    sin_ref[...] = (sa * cb + ca * sb).astype(sin_ref.dtype)


def _vmem_capacity_bytes(default=64 * 1024 * 1024):
    try:
        cap = getattr(pltpu.get_tpu_info(), "vmem_capacity_bytes", None)
        if cap:
            return int(cap)
    except Exception:
        pass
    return default                          # conservative (v7x per-core VMEM)


def _pick_tile_groups(seq_groups, lanes, k, out_dtype_bytes,
                      tile_positions=None, max_positions=8192):
    """Rows-per-block of the lane-packed (seq_groups, lanes) output."""
    if tile_positions is not None:
        tg = max(1, int(tile_positions) // k)
        if tg >= seq_groups:
            return seq_groups
        return max(8, (tg // 8) * 8)

    budget = _vmem_capacity_bytes() // 3
    # double-buffered per-group-row footprint: 2 outputs + 2 f32 local tables
    bytes_per_row = lanes * (2 * 2 * out_dtype_bytes + 2 * 2 * 4)
    tg = budget // bytes_per_row
    tg = min(tg, max(8, max_positions // k))
    tg = max(8, (tg // 8) * 8)
    if seq_groups <= tg:
        if seq_groups <= 8:
            return seq_groups               # tiny: one full-extent block
        # guarantee >= 2 grid steps so v7x shards the seq axis over both cores
        half = int(pl.cdiv(seq_groups, 2))
        return max(8, ((half + 7) // 8) * 8)
    return tg


def rotary_embedding(max_seq_len, dim, base=10000.0, ntk_alpha=1.0,
                     dtype=jnp.float32, tile_positions=None):
    """Pallas equivalent of RotaryEmbedding.forward(max_seq_len, ntk_alpha).

    Returns [cos, sin], each of shape (1, max_seq_len, 1, dim).
    Use dtype=jnp.bfloat16 to halve writeback bytes when the consumer applies
    RoPE in bf16 (all table math stays f32; only the store is cast).
    """
    assert dim % 2 == 0, "rotary dim must be even"
    seq = int(max_seq_len)

    # NTK-scaled base and inverse frequencies (tiny; matches the torch module).
    eff_base = base * (ntk_alpha ** (dim / (dim - 2)))
    inv_freq = 1.0 / (eff_base ** (jnp.arange(0, dim, 2, dtype=jnp.float32) / dim))
    inv_freq_full = jnp.concatenate([inv_freq, inv_freq])            # (dim,)

    # Lane-dense packing: put k consecutive positions on the 128-lane axis.
    k = 128 // dim if (dim < 128 and 128 % dim == 0) else 1
    lanes = k * dim
    seq_groups = int(pl.cdiv(seq, k))
    seq_pad = seq_groups * k

    inv_freq_packed = jnp.tile(inv_freq_full, (k,))                  # (lanes,)
    lane_off = jnp.repeat(jnp.arange(k, dtype=jnp.float32), dim)     # (lanes,)

    out_bytes = jnp.dtype(dtype).itemsize
    tile_groups = int(_pick_tile_groups(seq_groups, lanes, k, out_bytes,
                                        tile_positions))
    grid_steps = int(pl.cdiv(seq_groups, tile_groups))

    # Grid-invariant local angles A[r, l] = (r*k + off[l]) * f[l] ...
    rows = jnp.arange(tile_groups, dtype=jnp.float32)[:, None]
    ang_a = (rows * float(k) + lane_off[None, :]) * inv_freq_packed[None, :]
    cos_a = jnp.cos(ang_a)
    sin_a = jnp.sin(ang_a)                                           # (tg, lanes)
    # ... and per-step base angles B[i, l] = (i * tile_groups * k) * f[l].
    base_pos = jnp.arange(grid_steps, dtype=jnp.float32) * float(tile_groups * k)
    ang_b = base_pos[:, None, None] * inv_freq_packed[None, None, :]  # (steps,1,lanes)
    cos_b = jnp.cos(ang_b)
    sin_b = jnp.sin(ang_b)

    # VMEM limit ~ 1.25x the actual pipelined footprint, clamped to physical.
    footprint = tile_groups * lanes * (2 * 2 * out_bytes + 2 * 2 * 4) + 4 * lanes * 4
    vmem_limit = int(min(_vmem_capacity_bytes(),
                         max(32 * 1024 * 1024, int(1.25 * footprint))))

    cost = pl.CostEstimate(
        flops=6 * seq_groups * lanes,
        transcendentals=0,
        bytes_accessed=2 * seq_groups * lanes * out_bytes
        + 2 * (tile_groups + grid_steps) * lanes * 4)

    cos2d, sin2d = pl.pallas_call(
        _rotary_combine_kernel,
        out_shape=(jax.ShapeDtypeStruct((seq_groups, lanes), dtype),
                   jax.ShapeDtypeStruct((seq_groups, lanes), dtype)),
        grid=(grid_steps,),
        in_specs=[
            pl.BlockSpec((tile_groups, lanes), lambda i: (0, 0)),   # cos_a (fetched once)
            pl.BlockSpec((tile_groups, lanes), lambda i: (0, 0)),   # sin_a (fetched once)
            pl.BlockSpec((1, 1, lanes), lambda i: (i, 0, 0)),       # cos_b row per step
            pl.BlockSpec((1, 1, lanes), lambda i: (i, 0, 0)),       # sin_b row per step
        ],
        out_specs=(pl.BlockSpec((tile_groups, lanes), lambda i: (i, 0)),
                   pl.BlockSpec((tile_groups, lanes), lambda i: (i, 0))),
        compiler_params=pltpu.CompilerParams(
            dimension_semantics=("parallel",),
            vmem_limit_bytes=vmem_limit),
        cost_estimate=cost,
    )(cos_a, sin_a, cos_b, sin_b)

    cos = cos2d.reshape(seq_pad, dim)
    sin = sin2d.reshape(seq_pad, dim)
    if seq_pad != seq:
        cos = cos[:seq]
        sin = sin[:seq]
    return [cos.reshape(1, seq, 1, dim), sin.reshape(1, seq, 1, dim)]


def rotary_embedding_ref(max_seq_len, dim, base=10000.0, ntk_alpha=1.0):
    """Pure-jnp reference mirroring the torch module."""
    eff_base = base * (ntk_alpha ** (dim / (dim - 2)))
    inv_freq = 1.0 / (eff_base ** (jnp.arange(0, dim, 2, dtype=jnp.float32) / dim))
    pos = jnp.arange(max_seq_len, dtype=jnp.float32)
    freqs = jnp.outer(pos, inv_freq)
    emb = jnp.concatenate([freqs, freqs], axis=-1).reshape(1, max_seq_len, 1, dim)
    return [jnp.cos(emb), jnp.sin(emb)]


if __name__ == "__main__":
    # The module's forward takes no tensor inputs (only max_seq_len, ntk_alpha);
    # the PRNG key is created per convention but not needed.
    _ = jax.random.PRNGKey(0)

    # Primary small config: rotary head dim 32, seq 8 (single-step, lane-packed k=4).
    dim, max_seq_len = 32, 8
    cos, sin = rotary_embedding(max_seq_len, dim)
    jax.block_until_ready((cos, sin))
    cos_ref, sin_ref = rotary_embedding_ref(max_seq_len, dim)
    assert cos.shape == (1, max_seq_len, 1, dim), cos.shape
    assert sin.shape == (1, max_seq_len, 1, dim), sin.shape
    assert jnp.allclose(cos, cos_ref, atol=1e-4, rtol=1e-4), "cos mismatch"
    assert jnp.allclose(sin, sin_ref, atol=1e-4, rtol=1e-4), "sin mismatch"

    # Second config: multi-step grid, ragged last block, seq not a multiple of
    # the packing factor, non-default ntk_alpha.
    dim2, seq2, ntk = 64, 51, 2.0
    cos2, sin2 = rotary_embedding(seq2, dim2, ntk_alpha=ntk, tile_positions=16)
    jax.block_until_ready((cos2, sin2))
    cos2_ref, sin2_ref = rotary_embedding_ref(seq2, dim2, ntk_alpha=ntk)
    assert cos2.shape == (1, seq2, 1, dim2), cos2.shape
    assert jnp.allclose(cos2, cos2_ref, atol=1e-4, rtol=1e-4), "cos mismatch (cfg2)"
    assert jnp.allclose(sin2, sin2_ref, atol=1e-4, rtol=1e-4), "sin mismatch (cfg2)"

    print("KERNEL_OK")
</pallas_src>

<mosaic_0001>
module attributes {stable_mosaic.version = 11 : i64} {
  func.func @_rotary_combine_kernel(%arg0: i32, %arg1: memref<2x128xf32, #tpu.memory_space<vmem>>, %arg2: memref<2x128xf32, #tpu.memory_space<vmem>>, %arg3: memref<1x1x128xf32, #tpu.memory_space<vmem>>, %arg4: memref<1x1x128xf32, #tpu.memory_space<vmem>>, %arg5: memref<2x128xf32, #tpu.memory_space<vmem>>, %arg6: memref<2x128xf32, #tpu.memory_space<vmem>>) attributes {dimension_semantics = [#tpu.dimension_semantics<parallel>], iteration_bounds = array<i64: 1>, scalar_prefetch = 0 : i64, scratch_operands = 0 : i64, tpu.core_type = #tpu.core_type<tc>, window_params = [{pipeline_mode = #tpu.pipeline_mode<synchronous>, transform_indices = @transform_0, window_bounds = array<i64: 2, 128>}, {pipeline_mode = #tpu.pipeline_mode<synchronous>, transform_indices = @transform_1, window_bounds = array<i64: 2, 128>}, {transform_indices = @transform_2, window_bounds = array<i64: 1, 1, 128>}, {transform_indices = @transform_3, window_bounds = array<i64: 1, 1, 128>}, {transform_indices = @transform_4, window_bounds = array<i64: 2, 128>}, {transform_indices = @transform_5, window_bounds = array<i64: 2, 128>}]} {
    %c0 = arith.constant 0 : index
    %c0_0 = arith.constant 0 : index
    %0 = vector.load %arg1[%c0, %c0_0] : memref<2x128xf32, #tpu.memory_space<vmem>>, vector<2x128xf32>
    %c0_1 = arith.constant 0 : index
    %c0_2 = arith.constant 0 : index
    %1 = vector.load %arg2[%c0_1, %c0_2] : memref<2x128xf32, #tpu.memory_space<vmem>>, vector<2x128xf32>
    %c0_3 = arith.constant 0 : index
    %c0_4 = arith.constant 0 : index
    %c0_5 = arith.constant 0 : index
    %2 = vector.load %arg3[%c0_3, %c0_4, %c0_5] : memref<1x1x128xf32, #tpu.memory_space<vmem>>, vector<1x1x128xf32>
    %3 = vector.shape_cast %2 : vector<1x1x128xf32> to vector<1x128xf32>
    %c0_6 = arith.constant 0 : index
    %c0_7 = arith.constant 0 : index
    %c0_8 = arith.constant 0 : index
    %4 = vector.load %arg4[%c0_6, %c0_7, %c0_8] : memref<1x1x128xf32, #tpu.memory_space<vmem>>, vector<1x1x128xf32>
    %5 = vector.shape_cast %4 : vector<1x1x128xf32> to vector<1x128xf32>
    %6 = vector.broadcast %3 : vector<1x128xf32> to vector<2x128xf32>
    %7 = arith.mulf %0, %6 : vector<2x128xf32>
    %8 = vector.broadcast %5 : vector<1x128xf32> to vector<2x128xf32>
    %9 = arith.mulf %1, %8 : vector<2x128xf32>
    %10 = arith.subf %7, %9 : vector<2x128xf32>
    %c0_9 = arith.constant 0 : index
    %c0_10 = arith.constant 0 : index
    %11 = vector.load %arg5[%c0_9, %c0_10] : memref<2x128xf32, #tpu.memory_space<vmem>>, vector<2x128xf32>
    tpu.vector_store %arg5[%c0_9, %c0_10], %10 {strides = array<i32>} : memref<2x128xf32, #tpu.memory_space<vmem>>, vector<2x128xf32>,
    %12 = vector.broadcast %3 : vector<1x128xf32> to vector<2x128xf32>
    %13 = arith.mulf %1, %12 : vector<2x128xf32>
    %14 = vector.broadcast %5 : vector<1x128xf32> to vector<2x128xf32>
    %15 = arith.mulf %0, %14 : vector<2x128xf32>
    %16 = arith.addf %13, %15 : vector<2x128xf32>
    %c0_11 = arith.constant 0 : index
    %c0_12 = arith.constant 0 : index
    %17 = vector.load %arg6[%c0_11, %c0_12] : memref<2x128xf32, #tpu.memory_space<vmem>>, vector<2x128xf32>
    tpu.vector_store %arg6[%c0_11, %c0_12], %16 {strides = array<i32>} : memref<2x128xf32, #tpu.memory_space<vmem>>, vector<2x128xf32>,
    return
  }
  func.func @transform_0(%arg0: i32) -> (i32, i32) {
    %c0_i32 = arith.constant 0 : i32
    %c0_i32_0 = arith.constant 0 : i32
    %c0_i32_1 = arith.constant 0 : i32
    return %c0_i32, %c0_i32_0 : i32, i32
  }
  func.func @transform_1(%arg0: i32) -> (i32, i32) {
    %c0_i32 = arith.constant 0 : i32
    %c0_i32_0 = arith.constant 0 : i32
    %c0_i32_1 = arith.constant 0 : i32
    return %c0_i32, %c0_i32_0 : i32, i32
  }
  func.func @transform_2(%arg0: i32) -> (i32, i32, i32) {
    %c0_i32 = arith.constant 0 : i32
    %c0_i32_0 = arith.constant 0 : i32
    %c0_i32_1 = arith.constant 0 : i32
    return %arg0, %c0_i32, %c0_i32_0 : i32, i32, i32
  }
  func.func @transform_3(%arg0: i32) -> (i32, i32, i32) {
    %c0_i32 = arith.constant 0 : i32
    %c0_i32_0 = arith.constant 0 : i32
    %c0_i32_1 = arith.constant 0 : i32
    return %arg0, %c0_i32, %c0_i32_0 : i32, i32, i32
  }
  func.func @transform_4(%arg0: i32) -> (i32, i32) {
    %c0_i32 = arith.constant 0 : i32
    %c0_i32_0 = arith.constant 0 : i32
    return %arg0, %c0_i32 : i32, i32
  }
  func.func @transform_5(%arg0: i32) -> (i32, i32) {
    %c0_i32 = arith.constant 0 : i32
    %c0_i32_0 = arith.constant 0 : i32
    return %arg0, %c0_i32 : i32, i32
  }
}

</mosaic_0001>

<llo_original>
// kernel: tpu_custom_call.1
$region0: #{tpu_custom_call.1}
  #allocation0 [shape = 'u32[]', space=smem, size = 0x4, offset = 0x4, fixed_abs, tag = 'smem constant byte address 0x4 - core index']
  #allocation1 [shape = 'u32[144,128]{1,0:T(1,128)}', space=vmem, size = 0x12000, scoped, tag = 'internal scratch']
  %s0 = inlined_call_operand.hbm [shape: f32[2,128], index: 0, kind: input, shape index: {}]
  %s1 = inlined_call_operand.hbm [shape: f32[2,128], index: 1, kind: input, shape index: {}]
  %s2 = inlined_call_operand.vmem [shape: f32[1,1,128], index: 2, kind: input, shape index: {}]
  %s3 = inlined_call_operand.vmem [shape: f32[1,1,128], index: 3, kind: input, shape index: {}]
  %s4 = inlined_call_operand.hbm [shape: f32[2,128], index: 4, kind: output, shape index: {0}]
  %s5 = inlined_call_operand.hbm [shape: f32[2,128], index: 5, kind: output, shape index: {1}]
  %6 = xla_tuple %s4, %s5
  %s7 = sld [smem:[#allocation0]]
  $region42: #{tpu_custom_call.1} parent=0
    _
  %s9 = ssub.s32 1, %s7
  %s10 = scalar_select 0, %s9, %s7
  $region1: #{tpu_custom_call.1} parent=0
    #allocation2 [shape = 'u8[1024]{0}', space=vmem, size = 0x400, scoped, tag = 'input window, operand 0, single buffered']
    #allocation3 [shape = 's32[1]{0}', space=sflag, size = 0x4, scoped, tag = 'scoped memory for tpu_custom_call.1']
    #allocation4 [shape = 's32[1]{0}', space=sflag, size = 0x4, scoped, tag = 'scoped memory for tpu_custom_call.1']
    #allocation5 [shape = 'u8[1024]{0}', space=vmem, size = 0x400, scoped, tag = 'input window, operand 1, single buffered']
    #allocation6 [shape = 's32[1]{0}', space=sflag, size = 0x4, scoped, tag = 'scoped memory for tpu_custom_call.1']
    #allocation7 [shape = 'u8[1024]{0}', space=vmem, size = 0x400, scoped, tag = 'output window, operand 0, single buffered']
    #allocation8 [shape = 'u8[1024]{0}', space=vmem, size = 0x400, scoped, tag = 'output window, operand 1, single buffered']
    #allocation9 [shape = 's32[1]{0}', space=sflag, size = 0x4, scoped, tag = 'scoped memory for tpu_custom_call.1']
    %11 = vsyncpa [#allocation3], 0
    %12 = vsyncpa [#allocation6], 0
    %13 = vsyncpa [#allocation4], 0
    %14 = vsyncpa [#allocation9], 0
    // Predicated region
    $region2: #{tpu_custom_call.1} parent=1 // pred_check
      _
    $region3: #{tpu_custom_call.1} parent=1 // pred_check_branch
      %16 = sbr.rel (0) target = $region5
    $region4: #{tpu_custom_call.1} parent=1 // pred_region
      %s18 = ssub.s32 32, 32
      %19 = vsyncadd [#allocation3], %s18
      %s21 = sshll.u32 [#allocation2], 4
      %s22 = int_to_ptr.vmem [resolvable:$true] %s21
      %24 = dma.hbm_to_vmem [thread:$0]  %s0, 32, %s22, [#allocation3]
    $region5: #{tpu_custom_call.1} parent=1 // pred_fallthru
      _
    // Predicated region
    $region6: #{tpu_custom_call.1} parent=1 // pred_check
      _
    $region7: #{tpu_custom_call.1} parent=1 // pred_check_branch
      %26 = sbr.rel (0) target = $region9
    $region8: #{tpu_custom_call.1} parent=1 // pred_region
      %s28 = ssub.s32 32, 32
      %29 = vsyncadd [#allocation6], %s28
      %s31 = sshll.u32 [#allocation5], 4
      %s32 = int_to_ptr.vmem [resolvable:$true] %s31
      %34 = dma.hbm_to_vmem [thread:$0]  %s1, 32, %s32, [#allocation6]
    $region9: #{tpu_custom_call.1} parent=1 // pred_fallthru
      _
    // Predicated region
    $region10: #{tpu_custom_call.1} parent=1 // pred_check
      _
    $region11: #{tpu_custom_call.1} parent=1 // pred_check_branch
      %36 = sbr.rel (0) target = $region13
    $region12: #{tpu_custom_call.1} parent=1 // pred_region
      _
    $region13: #{tpu_custom_call.1} parent=1 // pred_fallthru
      _
    // Predicated region
    $region14: #{tpu_custom_call.1} parent=1 // pred_check
      _
    $region15: #{tpu_custom_call.1} parent=1 // pred_check_branch
      %38 = sbr.rel (0) target = $region17
    $region16: #{tpu_custom_call.1} parent=1 // pred_region
      _
    $region17: #{tpu_custom_call.1} parent=1 // pred_fallthru
      _
    // Predicated region
    $region18: #{tpu_custom_call.1} parent=1 // pred_check
      _
    $region19: #{tpu_custom_call.1} parent=1 // pred_check_branch
      %40 = sbr.rel (0) target = $region21
    $region20: #{tpu_custom_call.1} parent=1 // pred_region
      %41 = dma.done [#allocation3], 32
    $region21: #{tpu_custom_call.1} parent=1 // pred_fallthru
      _
    // Predicated region
    $region22: #{tpu_custom_call.1} parent=1 // pred_check
      _
    $region23: #{tpu_custom_call.1} parent=1 // pred_check_branch
      %43 = sbr.rel (0) target = $region25
    $region24: #{tpu_custom_call.1} parent=1 // pred_region
      %44 = dma.done [#allocation6], 32
    $region25: #{tpu_custom_call.1} parent=1 // pred_fallthru
      _
    %v45 = vld [vmem:[#allocation2] sm:$0x3]
    %v46 = vld [vmem:[#allocation5] sm:$0x3]
    %v47 = vld [vmem:[%s2] sm:$0x1]
    %v48 = vld [vmem:[%s3] sm:$0x1]
    %v50 = vlaneseq
    %v51 = vshrl.u32 %v50, 7
    %v52 = vsub.s32 0, %v51
    %v53 = vrot.slane %v47, %v52
    %v55 = vmul.f32 %v45, %v53
    %v57 = vlaneseq
    %v58 = vshrl.u32 %v57, 7
    %v59 = vsub.s32 0, %v58
    %v60 = vrot.slane %v48, %v59
    %v62 = vmul.f32 %v46, %v60
    %v63 = vsub.f32 %v55, %v62
    %64 = vst [vmem:[#allocation7] sm:$0x3] %v63
    %v65 = vmul.f32 %v46, %v53
    %v66 = vmul.f32 %v45, %v60
    %v67 = vadd.f32 %v65, %v66
    %68 = vst [vmem:[#allocation8] sm:$0x3] %v67
    // Predicated region
    $region26: #{tpu_custom_call.1} parent=1 // pred_check
      _
    $region27: #{tpu_custom_call.1} parent=1 // pred_check_branch
      %70 = sbr.rel (0) target = $region29
    $region28: #{tpu_custom_call.1} parent=1 // pred_region
      %s72 = ssub.s32 32, 32
      %73 = vsyncadd [#allocation4], %s72
      %s75 = sshll.u32 [#allocation7], 4
      %s76 = int_to_ptr.vmem [resolvable:$true] %s75
      %78 = dma.vmem_to_hbm [thread:$0]  %s76, 32, %s4, [#allocation4]
    $region29: #{tpu_custom_call.1} parent=1 // pred_fallthru
      _
    // Predicated region
    $region30: #{tpu_custom_call.1} parent=1 // pred_check
      _
    $region31: #{tpu_custom_call.1} parent=1 // pred_check_branch
      %80 = sbr.rel (0) target = $region33
    $region32: #{tpu_custom_call.1} parent=1 // pred_region
      %s82 = ssub.s32 32, 32
      %83 = vsyncadd [#allocation9], %s82
      %s85 = sshll.u32 [#allocation8], 4
      %s86 = int_to_ptr.vmem [resolvable:$true] %s85
      %88 = dma.vmem_to_hbm [thread:$0]  %s86, 32, %s5, [#allocation9]
    $region33: #{tpu_custom_call.1} parent=1 // pred_fallthru
      _
    // Predicated region
    $region34: #{tpu_custom_call.1} parent=1 // pred_check
      _
    $region35: #{tpu_custom_call.1} parent=1 // pred_check_branch
      %90 = sbr.rel (0) target = $region37
    $region36: #{tpu_custom_call.1} parent=1 // pred_region
      %91 = dma.done [#allocation4], 32
    $region37: #{tpu_custom_call.1} parent=1 // pred_fallthru
      _
    // Predicated region
    $region38: #{tpu_custom_call.1} parent=1 // pred_check
      _
    $region39: #{tpu_custom_call.1} parent=1 // pred_check_branch
      %93 = sbr.rel (0) target = $region41
    $region40: #{tpu_custom_call.1} parent=1 // pred_region
      %94 = dma.done [#allocation9], 32
    $region41: #{tpu_custom_call.1} parent=1 // pred_fallthru
      _
    %95 = vsyncpa [#allocation3], 1
    %96 = vsyncpa [#allocation6], 1
    %97 = vsyncpa [#allocation4], 1
    %98 = vsyncpa [#allocation9], 1

</llo_original>
